<compile_context>
chip_gen: v7x
topology: tpu7x:2x2x1
jax: 0.10.0
libtpu: 0.0.40
codegen_flags: <defaults>
</compile_context>

<pallas_src>
import jax
import jax.numpy as jnp
from jax.experimental import pallas as pl
from jax.experimental.pallas import tpu as pltpu


def _mtl_auc_kernel(pos_ref, neg_ref, w_ref, o_ref):
    # pos_ref, neg_ref: (TILE_N, d) native dtype; w_ref: (d, 1) native dtype;
    # o_ref: (TILE_N, 1) f32.
    s_pos = jnp.dot(pos_ref[...], w_ref[...], preferred_element_type=jnp.float32)
    s_neg = jnp.dot(neg_ref[...], w_ref[...], preferred_element_type=jnp.float32)
    diff = 1.0 - s_pos + s_neg
    o_ref[...] = diff * diff


def _round_up(x: int, m: int) -> int:
    return ((x + m - 1) // m) * m


def mtl_auc_forward(W: jax.Array, pos: jax.Array, neg: jax.Array, i: int) -> jax.Array:
    """W: (d, T); pos, neg: (N, d); i: static task index. Returns (N,) f32."""
    d, _ = W.shape
    N = pos.shape[0]
    assert neg.shape == pos.shape, "PyTorch broadcasting requires pos/neg same shape"

    in_dtype = pos.dtype
    itemsize = jnp.dtype(in_dtype).itemsize

    # Column i of W (== W.t()[i]) as a (d, 1) vector in the input dtype
    # (tiny; stays VMEM-resident via the constant index_map below).
    w_col = jax.lax.dynamic_slice_in_dim(W, i, 1, axis=1).astype(in_dtype)

    # --- tile-size selection (memory-bound; use the real padded footprint) ---
    sublane = max(8, 32 // itemsize)            # 8 f32 / 16 bf16 / 32 int8
    padded_row_bytes = _round_up(d, 128) * itemsize
    # ~2 MiB padded per input tile -> 2 inputs x 2 buffers ~= 8 MiB of VMEM:
    # comfortably inside v7x's 32 MiB scoped / 64 MiB physical VMEM.
    budget_rows = max(sublane, (2 * 1024 * 1024) // padded_row_bytes)
    budget_rows = (budget_rows // sublane) * sublane
    tile_n = min(budget_rows, _round_up(N, sublane))
    num_tiles = pl.cdiv(N, tile_n)              # ragged tail handled by Pallas

    out = pl.pallas_call(
        _mtl_auc_kernel,
        out_shape=jax.ShapeDtypeStruct((N, 1), jnp.float32),
        grid=(num_tiles,),
        in_specs=[
            pl.BlockSpec((tile_n, d), lambda n: (n, 0)),
            pl.BlockSpec((tile_n, d), lambda n: (n, 0)),
            # Constant block index -> fetched once, kept resident across steps.
            pl.BlockSpec((d, 1), lambda n: (0, 0)),
        ],
        out_specs=pl.BlockSpec((tile_n, 1), lambda n: (n, 0)),
        compiler_params=pltpu.CompilerParams(
            dimension_semantics=("parallel",),   # independent tiles -> megacore split
            vmem_limit_bytes=32 * 1024 * 1024,   # safe on v5e/v6e/v7x
        ),
    )(pos, neg, w_col)

    return out[:, 0]


def mtl_auc_reference(W, pos, neg, i):
    w = W[:, i].astype(jnp.float32)        # W.t()[i]
    s_pos = pos.astype(jnp.float32) @ w
    s_neg = neg.astype(jnp.float32) @ w
    return (1.0 - s_pos + s_neg) ** 2


if __name__ == "__main__":
    key = jax.random.PRNGKey(0)
    k_w, k_p, k_n = jax.random.split(key, 3)

    d, T, N = 32, 4, 8          # feature dim, tasks, instances per task
    task_i = 1

    W = jax.random.normal(k_w, (d, T), dtype=jnp.float32) * 0.1
    pos = jax.random.normal(k_p, (N, d), dtype=jnp.float32)
    neg = jax.random.normal(k_n, (N, d), dtype=jnp.float32)

    pred = mtl_auc_forward(W, pos, neg, task_i)
    jax.block_until_ready(pred)
    ref = mtl_auc_reference(W, pos, neg, task_i)
    assert pred.shape == (N,)
    assert jnp.allclose(pred, ref, atol=1e-5, rtol=1e-5), (pred, ref)

    # Second case: N not a multiple of the sublane/tile (exercises the ragged
    # last-block path with no wrapper padding).
    N2 = 10
    pos2 = jax.random.normal(jax.random.PRNGKey(1), (N2, d), dtype=jnp.float32)
    neg2 = jax.random.normal(jax.random.PRNGKey(2), (N2, d), dtype=jnp.float32)
    pred2 = mtl_auc_forward(W, pos2, neg2, 2)
    jax.block_until_ready(pred2)
    ref2 = mtl_auc_reference(W, pos2, neg2, 2)
    assert pred2.shape == (N2,)
    assert jnp.allclose(pred2, ref2, atol=1e-5, rtol=1e-5), (pred2, ref2)

    print("KERNEL_OK")
</pallas_src>

<mosaic_0001>
module attributes {stable_mosaic.version = 11 : i64} {
  func.func @_mtl_auc_kernel(%arg0: i32, %arg1: memref<8x32xf32, #tpu.memory_space<vmem>>, %arg2: memref<8x32xf32, #tpu.memory_space<vmem>>, %arg3: memref<32x1xf32, #tpu.memory_space<vmem>>, %arg4: memref<8x1xf32, #tpu.memory_space<vmem>>) attributes {dimension_semantics = [#tpu.dimension_semantics<parallel>], iteration_bounds = array<i64: 1>, scalar_prefetch = 0 : i64, scratch_operands = 0 : i64, tpu.core_type = #tpu.core_type<tc>, window_params = [{transform_indices = @transform_0, window_bounds = array<i64: 8, 32>}, {transform_indices = @transform_1, window_bounds = array<i64: 8, 32>}, {pipeline_mode = #tpu.pipeline_mode<synchronous>, transform_indices = @transform_2, window_bounds = array<i64: 32, 1>}, {transform_indices = @transform_3, window_bounds = array<i64: 8, 1>}]} {
    %c0 = arith.constant 0 : index
    %c0_0 = arith.constant 0 : index
    %0 = vector.load %arg1[%c0, %c0_0] : memref<8x32xf32, #tpu.memory_space<vmem>>, vector<8x32xf32>
    %c0_1 = arith.constant 0 : index
    %c0_2 = arith.constant 0 : index
    %1 = vector.load %arg3[%c0_1, %c0_2] : memref<32x1xf32, #tpu.memory_space<vmem>>, vector<32x1xf32>
    %cst = arith.constant dense<0.000000e+00> : vector<8x1xf32>
    %2 = tpu.matmul %0, %1, %cst {dimension_numbers = #tpu.dot_dimension_numbers<[1], [0], [0], [1], [0, 0, 1, 1], [], []>} : vector<8x32xf32>, vector<32x1xf32>, vector<8x1xf32> -> vector<8x1xf32>
    %c0_3 = arith.constant 0 : index
    %c0_4 = arith.constant 0 : index
    %3 = vector.load %arg2[%c0_3, %c0_4] : memref<8x32xf32, #tpu.memory_space<vmem>>, vector<8x32xf32>
    %c0_5 = arith.constant 0 : index
    %c0_6 = arith.constant 0 : index
    %4 = vector.load %arg3[%c0_5, %c0_6] : memref<32x1xf32, #tpu.memory_space<vmem>>, vector<32x1xf32>
    %cst_7 = arith.constant dense<0.000000e+00> : vector<8x1xf32>
    %5 = tpu.matmul %3, %4, %cst_7 {dimension_numbers = #tpu.dot_dimension_numbers<[1], [0], [0], [1], [0, 0, 1, 1], [], []>} : vector<8x32xf32>, vector<32x1xf32>, vector<8x1xf32> -> vector<8x1xf32>
    %cst_8 = arith.constant 1.000000e+00 : f32
    %6 = vector.broadcast %cst_8 : f32 to vector<8x1xf32>
    %7 = arith.subf %6, %2 : vector<8x1xf32>
    %8 = arith.addf %7, %5 : vector<8x1xf32>
    %9 = arith.mulf %8, %8 : vector<8x1xf32>
    %c0_9 = arith.constant 0 : index
    %c0_10 = arith.constant 0 : index
    %10 = vector.load %arg4[%c0_9, %c0_10] : memref<8x1xf32, #tpu.memory_space<vmem>>, vector<8x1xf32>
    tpu.vector_store %arg4[%c0_9, %c0_10], %9 {strides = array<i32>} : memref<8x1xf32, #tpu.memory_space<vmem>>, vector<8x1xf32>,
    return
  }
  func.func @transform_0(%arg0: i32) -> (i32, i32) {
    %c0_i32 = arith.constant 0 : i32
    %c0_i32_0 = arith.constant 0 : i32
    return %arg0, %c0_i32 : i32, i32
  }
  func.func @transform_1(%arg0: i32) -> (i32, i32) {
    %c0_i32 = arith.constant 0 : i32
    %c0_i32_0 = arith.constant 0 : i32
    return %arg0, %c0_i32 : i32, i32
  }
  func.func @transform_2(%arg0: i32) -> (i32, i32) {
    %c0_i32 = arith.constant 0 : i32
    %c0_i32_0 = arith.constant 0 : i32
    %c0_i32_1 = arith.constant 0 : i32
    return %c0_i32, %c0_i32_0 : i32, i32
  }
  func.func @transform_3(%arg0: i32) -> (i32, i32) {
    %c0_i32 = arith.constant 0 : i32
    %c0_i32_0 = arith.constant 0 : i32
    return %arg0, %c0_i32 : i32, i32
  }
}

</mosaic_0001>

<llo_original>
// kernel: tpu_custom_call.1
$region0: #{tpu_custom_call.1}
  #allocation0 [shape = 'u32[]', space=smem, size = 0x4, offset = 0x4, fixed_abs, tag = 'smem constant byte address 0x4 - core index']
  #allocation1 [shape = 'u32[144,128]{1,0:T(1,128)}', space=vmem, size = 0x12000, scoped, tag = 'internal scratch']
  %s0 = inlined_call_operand.vmem [shape: f32[8,32], index: 0, kind: input, shape index: {}]
  %s1 = inlined_call_operand.vmem [shape: f32[8,32], index: 1, kind: input, shape index: {}]
  %s2 = inlined_call_operand.vmem [shape: f32[32,1], index: 2, kind: input, shape index: {}]
  %s3 = inlined_call_operand.vmem [shape: f32[8,1], index: 3, kind: output, shape index: {}]
  %s4 = sld [smem:[#allocation0]]
  $region22: #{tpu_custom_call.1} parent=0
    _
  %s6 = ssub.s32 1, %s4
  %s7 = scalar_select 0, %s6, %s4
  // Predicated region
  $region2: #{tpu_custom_call.1} parent=0 // pred_check
    _
  $region3: #{tpu_custom_call.1} parent=0 // pred_check_branch
    %9 = sbr.rel (0) target = $region5
  $region4: #{tpu_custom_call.1} parent=0 // pred_region
    _
  $region5: #{tpu_custom_call.1} parent=0 // pred_fallthru
    _
  // Predicated region
  $region6: #{tpu_custom_call.1} parent=0 // pred_check
    _
  $region7: #{tpu_custom_call.1} parent=0 // pred_check_branch
    %11 = sbr.rel (0) target = $region9
  $region8: #{tpu_custom_call.1} parent=0 // pred_region
    _
  $region9: #{tpu_custom_call.1} parent=0 // pred_fallthru
    _
  // Predicated region
  $region10: #{tpu_custom_call.1} parent=0 // pred_check
    _
  $region11: #{tpu_custom_call.1} parent=0 // pred_check_branch
    %13 = sbr.rel (0) target = $region13
  $region12: #{tpu_custom_call.1} parent=0 // pred_region
    _
  $region13: #{tpu_custom_call.1} parent=0 // pred_fallthru
    _
  %v14 = vld [vmem:[%s0] sm:$0xff]
  %v15 = vld [vmem:[%s2] sm:$0xff]
  %v16 = vld [vmem:[%s2 + $0x8] sm:$0xff]
  %v17 = vld [vmem:[%s2 + $0x10] sm:$0xff]
  %v18 = vld [vmem:[%s2 + $0x18] sm:$0xff]
  %vm19 = vcmask 261120
  %v21 = vsel %vm19, %v14, 0
  %23 = vmatprep.subr.mxu0 0.0
  %24 = vmatpush1.msra.mxu0 %v15
  %25 = vmatprep.subr.mxu0 0.0
  %26 = vmatpush1.msra.mxu0 %v16
  %27 = vmatprep.subr.mxu0 0.0
  %28 = vmatpush1.msra.mxu0 %v17
  %29 = vmatprep.subr.mxu0 0.0
  %30 = vmatpush1.msra.mxu0 %v18
  %31 = vmatprep.subr.mxu0 0.0
  %32 = vmatpush1.msra.mxu0 0.0
  %33 = vmatprep.subr.mxu0 0.0
  %34 = vmatpush1.msra.mxu0 0.0
  %35 = vmatprep.subr.mxu0 0.0
  %36 = vmatpush1.msra.mxu0 0.0
  %37 = vmatprep.subr.mxu0 0.0
  %38 = vmatpush1.msra.mxu0 0.0
  %39 = vmatprep.subr.mxu0 0.0
  %40 = vmatpush1.msra.mxu0 0.0
  %41 = vmatprep.subr.mxu0 0.0
  %42 = vmatpush1.msra.mxu0 0.0
  %43 = vmatprep.subr.mxu0 0.0
  %44 = vmatpush1.msra.mxu0 0.0
  %45 = vmatprep.subr.mxu0 0.0
  %46 = vmatpush1.msra.mxu0 0.0
  %47 = vmatprep.subr.mxu0 0.0
  %48 = vmatpush1.msra.mxu0 0.0
  %49 = vmatprep.subr.mxu0 0.0
  %50 = vmatpush1.msra.mxu0 0.0
  %51 = vmatprep.subr.mxu0 0.0
  %52 = vmatpush1.msra.mxu0 0.0
  %53 = vmatprep.subr.mxu0 0.0
  %54 = vmatpush1.msra.mxu0 0.0
  %55 = vmatprep.subr.mxu0 0.0
  %56 = vmatpush1.msra.mxu0 0.0
  %57 = vmatprep.subr.mxu0 0.0
  %58 = vmatpush1.msra.mxu0 0.0
  %59 = vmatprep.subr.mxu0 0.0
  %60 = vmatpush1.msra.mxu0 0.0
  %61 = vmatprep.subr.mxu0 0.0
  %62 = vmatpush1.msra.mxu0 0.0
  %63 = vmatprep.subr.mxu0 0.0
  %64 = vmatpush1.msra.mxu0 0.0
  %65 = vmatprep.subr.mxu0 0.0
  %66 = vmatpush1.msra.mxu0 0.0
  %67 = vmatprep.subr.mxu0 0.0
  %68 = vmatpush1.msra.mxu0 0.0
  %69 = vmatprep.subr.mxu0 0.0
  %70 = vmatpush1.msra.mxu0 0.0
  %71 = vmatprep.subr.mxu0 0.0
  %72 = vmatpush1.msra.mxu0 0.0
  %73 = vmatprep.subr.mxu0 0.0
  %74 = vmatpush1.msra.mxu0 0.0
  %75 = vmatprep.subr.mxu0 0.0
  %76 = vmatpush1.msra.mxu0 0.0
  %77 = vmatprep.subr.mxu0 0.0
  %78 = vmatpush1.msra.mxu0 0.0
  %79 = vmatprep.subr.mxu0 0.0
  %80 = vmatpush1.msra.mxu0 0.0
  %81 = vmatprep.subr.mxu0 0.0
  %82 = vmatpush1.msra.mxu0 0.0
  %83 = vmatprep.subr.mxu0 0.0
  %84 = vmatpush1.msra.mxu0 0.0
  %85 = vmatprep.subr.mxu0 0.0
  %86 = vmatpush1.msra.mxu0 0.0
  %87 = vmatprep.mubr.f32.mxu0 0.0
  %88 = vmatmul.mubr.f32.gmra.mrb[0].mxu0 %v21
  %v89 = vpop.f32.mrb[0].mxu0
  %v90 = vadd.f32 0.0, %v89
  %v91 = vpop.f32.mrb[0].mxu0
  %92 = vdwg.mxu0
  %v93 = vld [vmem:[%s1] sm:$0xff]
  %v95 = vsel %vm19, %v93, 0
  %97 = vmatprep.subr.mxu0 0.0
  %98 = vmatpush1.msra.mxu0 %v15
  %99 = vmatprep.subr.mxu0 0.0
  %100 = vmatpush1.msra.mxu0 %v16
  %101 = vmatprep.subr.mxu0 0.0
  %102 = vmatpush1.msra.mxu0 %v17
  %103 = vmatprep.subr.mxu0 0.0
  %104 = vmatpush1.msra.mxu0 %v18
  %105 = vmatprep.subr.mxu0 0.0
  %106 = vmatpush1.msra.mxu0 0.0
  %107 = vmatprep.subr.mxu0 0.0
  %108 = vmatpush1.msra.mxu0 0.0
  %109 = vmatprep.subr.mxu0 0.0
  %110 = vmatpush1.msra.mxu0 0.0
  %111 = vmatprep.subr.mxu0 0.0
  %112 = vmatpush1.msra.mxu0 0.0
  %113 = vmatprep.subr.mxu0 0.0
  %114 = vmatpush1.msra.mxu0 0.0
  %115 = vmatprep.subr.mxu0 0.0
  %116 = vmatpush1.msra.mxu0 0.0
  %117 = vmatprep.subr.mxu0 0.0
  %118 = vmatpush1.msra.mxu0 0.0
  %119 = vmatprep.subr.mxu0 0.0
  %120 = vmatpush1.msra.mxu0 0.0
  %121 = vmatprep.subr.mxu0 0.0
  %122 = vmatpush1.msra.mxu0 0.0
  %123 = vmatprep.subr.mxu0 0.0
  %124 = vmatpush1.msra.mxu0 0.0
  %125 = vmatprep.subr.mxu0 0.0
  %126 = vmatpush1.msra.mxu0 0.0
  %127 = vmatprep.subr.mxu0 0.0
  %128 = vmatpush1.msra.mxu0 0.0
  %129 = vmatprep.subr.mxu0 0.0
  %130 = vmatpush1.msra.mxu0 0.0
  %131 = vmatprep.subr.mxu0 0.0
  %132 = vmatpush1.msra.mxu0 0.0
  %133 = vmatprep.subr.mxu0 0.0
  %134 = vmatpush1.msra.mxu0 0.0
  %135 = vmatprep.subr.mxu0 0.0
  %136 = vmatpush1.msra.mxu0 0.0
  %137 = vmatprep.subr.mxu0 0.0
  %138 = vmatpush1.msra.mxu0 0.0
  %139 = vmatprep.subr.mxu0 0.0
  %140 = vmatpush1.msra.mxu0 0.0
  %141 = vmatprep.subr.mxu0 0.0
  %142 = vmatpush1.msra.mxu0 0.0
  %143 = vmatprep.subr.mxu0 0.0
  %144 = vmatpush1.msra.mxu0 0.0
  %145 = vmatprep.subr.mxu0 0.0
  %146 = vmatpush1.msra.mxu0 0.0
  %147 = vmatprep.subr.mxu0 0.0
  %148 = vmatpush1.msra.mxu0 0.0
  %149 = vmatprep.subr.mxu0 0.0
  %150 = vmatpush1.msra.mxu0 0.0
  %151 = vmatprep.subr.mxu0 0.0
  %152 = vmatpush1.msra.mxu0 0.0
  %153 = vmatprep.subr.mxu0 0.0
  %154 = vmatpush1.msra.mxu0 0.0
  %155 = vmatprep.subr.mxu0 0.0
  %156 = vmatpush1.msra.mxu0 0.0
  %157 = vmatprep.subr.mxu0 0.0
  %158 = vmatpush1.msra.mxu0 0.0
  %159 = vmatprep.subr.mxu0 0.0
  %160 = vmatpush1.msra.mxu0 0.0
  %161 = vmatprep.mubr.f32.mxu0 0.0
  %162 = vmatmul.mubr.f32.gmra.mrb[0].mxu0 %v95
  %v163 = vpop.f32.mrb[0].mxu0
  %v164 = vadd.f32 0.0, %v163
  %v165 = vpop.f32.mrb[0].mxu0
  %166 = vdwg.mxu0
  %v167 = vsub.f32 1.0, %v90
  %v168 = vadd.f32 %v167, %v164
  %v169 = vmul.f32 %v168, %v168
  %vm170 = vcmask 7168
  %171 = vst.msk [vmem:[%s3] sm:$0xff] %vm170, %v169
  // Predicated region
  $region14: #{tpu_custom_call.1} parent=0 // pred_check
    _
  $region15: #{tpu_custom_call.1} parent=0 // pred_check_branch
    %173 = sbr.rel (0) target = $region17
  $region16: #{tpu_custom_call.1} parent=0 // pred_region
    _
  $region17: #{tpu_custom_call.1} parent=0 // pred_fallthru
    _
  // Predicated region
  $region18: #{tpu_custom_call.1} parent=0 // pred_check
    _
  $region19: #{tpu_custom_call.1} parent=0 // pred_check_branch
    %175 = sbr.rel (0) target = $region21
  $region20: #{tpu_custom_call.1} parent=0 // pred_region
    _
  $region21: #{tpu_custom_call.1} parent=0 // pred_fallthru
    _

</llo_original>
